<compile_context>
chip_gen: v7x
topology: tpu7x:2x2x1
jax: 0.10.0
libtpu: 0.0.40
codegen_flags: <defaults>
</compile_context>

<pallas_src>
import functools

import jax
import jax.numpy as jnp
import numpy as np
from jax.experimental import pallas as pl
from jax.experimental.pallas import tpu as pltpu


# ----------------------------------------------------------------------------
# helpers
# ----------------------------------------------------------------------------
def _round_up(x, m):
    return ((x + m - 1) // m) * m


def _cdiv(a, b):
    return -(-a // b)


def _sublane_multiple(itemsize):
    # vreg sublane packing: f32 -> 8 rows, bf16 -> 16, int8/fp8 -> 32.
    return max(8, 32 // int(itemsize))


def _tpu_config():
    """Generation-aware VMEM budgets + TensorCore count (best-effort, safe fallback)."""
    kind = ""
    try:
        kind = jax.devices()[0].device_kind.lower()
    except Exception:
        pass
    vmem_cap = None
    try:
        vmem_cap = int(pltpu.get_tpu_info().vmem_capacity_bytes)
    except Exception:
        vmem_cap = None
    if vmem_cap is None or vmem_cap <= 0:
        if ("v5 lite" in kind) or ("v5e" in kind) or ("v6" in kind):
            vmem_cap = 128 << 20          # v5e / v6e physical VMEM
        else:
            vmem_cap = 64 << 20           # v7x per-TC VMEM / conservative default
    # Tile-selection budget ~3/8 of VMEM, scoped limit ~72% of VMEM:
    #   128 MiB -> budget 48 MiB, limit 92 MiB;  64 MiB -> 24 MiB / 46 MiB.
    budget = int(min(56 << 20, max(8 << 20, int(vmem_cap * 0.375))))
    limit_hi = int(min(96 << 20, max(32 << 20, int(vmem_cap * 0.72))))
    num_tc = 2 if "7" in kind else 1      # v7x has 2 TensorCores per chip
    return {"budget": budget, "limit_hi": limit_hi, "num_tc": num_tc}


def _choose_tile(rows, per_row_bytes, sm, cfg, max_tile=4096):
    """Largest row tile (multiple of the sublane packing) fitting the VMEM budget.

    On dual-TC chips keep an even grid-step count so dimension_semantics=
    ("parallel",) load-balances; never force-split on single-TC chips.
    """
    rows = max(int(rows), 1)
    if rows <= sm:
        return rows                        # single full block ("equal full dim" rule)
    tile = int(cfg["budget"] // max(int(per_row_bytes), 1))
    tile = max(sm, (tile // sm) * sm)
    tile = min(tile, max_tile)
    rows_up = _round_up(rows, sm)
    tile = min(tile, rows_up)
    steps = _cdiv(rows_up, tile)
    if cfg["num_tc"] >= 2 and rows_up > sm and steps % 2 == 1:
        steps += 1
        tile = max(sm, _round_up(_cdiv(rows_up, steps), sm))
    return tile


def _vmem_limit(block_bytes, cfg):
    return int(min(max(int(block_bytes) + (8 << 20), 32 << 20), cfg["limit_hi"]))


# ----------------------------------------------------------------------------
# Kernels
# ----------------------------------------------------------------------------
def _weighted_sum_kernel(w_ref, x_ref, o_ref, *, num_views):
    """out[r, c] = sum_v w[v] * x[v, r, c].  w is a tiny SMEM vector; f32 acc."""
    acc = w_ref[0, 0] * x_ref[0].astype(jnp.float32)
    for v in range(1, num_views):                               # tiny static unroll
        acc = acc + w_ref[0, v] * x_ref[v].astype(jnp.float32)
    o_ref[...] = acc.astype(o_ref.dtype)


def _attention_fusion_kernel(x_ref, w1_ref, b1_ref, w2_ref, w3_ref, o_ref,
                             *, num_views):
    """Fused attention fusion for one row tile.

    score[v, n] = (tanh(tanh(x[v, n] @ W1 + b1) @ W2)) . w3
    weight      = softmax_v(score)
    out[n]      = sum_v weight[v, n] * x[v, n]
    """
    V = num_views
    x = x_ref[...]                                              # (V, TN, D), input dtype
    TN, D = x.shape[1], x.shape[2]

    # --- scorer: batched over all views; bf16 MXU matmuls, f32 accumulation --
    x2 = x.reshape(V * TN, D).astype(jnp.bfloat16)
    h = jnp.tanh(jnp.dot(x2, w1_ref[...],
                         preferred_element_type=jnp.float32) + b1_ref[...])
    t = jnp.tanh(jnp.dot(h.astype(jnp.bfloat16), w2_ref[...],
                         preferred_element_type=jnp.float32))   # (V*TN, 32) f32
    # (32 -> 1) projection as VPU multiply + lane reduction (no 1-column matmul).
    s = jnp.sum(t * w3_ref[...], axis=-1, keepdims=True).reshape(V, TN, 1)

    # --- softmax over the view axis (leading dim) -----------------------------
    m = jnp.max(s, axis=0, keepdims=True)
    e = jnp.exp(s - m)
    w = e / jnp.sum(e, axis=0, keepdims=True)                   # exact reciprocal

    # --- weighted sum of views: per-view f32 accumulator (small live set) -----
    acc = w[0] * x[0].astype(jnp.float32)
    for v in range(1, V):
        acc = acc + w[v] * x[v].astype(jnp.float32)
    o_ref[...] = acc.astype(o_ref.dtype)


# ----------------------------------------------------------------------------
# pallas_call wrappers
# ----------------------------------------------------------------------------
def _weighted_fusion(weights, emb, *, tile_r, vmem_limit):
    V, R, C = emb.shape
    return pl.pallas_call(
        functools.partial(_weighted_sum_kernel, num_views=V),
        out_shape=jax.ShapeDtypeStruct((R, C), emb.dtype),
        grid=(R // tile_r,),
        in_specs=[
            pl.BlockSpec(memory_space=pltpu.MemorySpace.SMEM),   # (1, V) weights
            pl.BlockSpec((V, tile_r, C), lambda i: (0, i, 0)),
        ],
        out_specs=pl.BlockSpec((tile_r, C), lambda i: (i, 0)),
        compiler_params=pltpu.CompilerParams(
            dimension_semantics=("parallel",),
            vmem_limit_bytes=vmem_limit),
    )(weights, emb)


def _attention_fusion(emb, w1, b1, w2, w3, *, tile_n, vmem_limit):
    V, N, D = emb.shape
    H = w1.shape[1]
    K = w2.shape[1]
    return pl.pallas_call(
        functools.partial(_attention_fusion_kernel, num_views=V),
        out_shape=jax.ShapeDtypeStruct((N, D), emb.dtype),
        grid=(N // tile_n,),
        in_specs=[
            pl.BlockSpec((V, tile_n, D), lambda i: (0, i, 0)),
            pl.BlockSpec((D, H), lambda i: (0, 0)),              # bf16
            pl.BlockSpec((1, H), lambda i: (0, 0)),               # f32
            pl.BlockSpec((H, K), lambda i: (0, 0)),               # bf16
            pl.BlockSpec((1, K), lambda i: (0, 0)),               # f32
        ],
        out_specs=pl.BlockSpec((tile_n, D), lambda i: (i, 0)),
        compiler_params=pltpu.CompilerParams(
            dimension_semantics=("parallel",),
            vmem_limit_bytes=vmem_limit),
    )(emb, w1, b1, w2, w3)


# ----------------------------------------------------------------------------
# Module
# ----------------------------------------------------------------------------
class FusionLayer:
    def __init__(self, num_views, fusion_type, in_size, hidden_size=64, key=None):
        self.fusion_type = fusion_type
        self.num_views = num_views
        self.in_size = in_size
        self.hidden_size = hidden_size
        if key is None:
            key = jax.random.PRNGKey(0)

        if fusion_type == 'weight':
            # nn.Parameter(torch.ones(num_views) / num_views)
            self.weight = jnp.ones((num_views,), jnp.float32) / num_views

        if fusion_type == 'attention':
            k1, k2, k3, k4 = jax.random.split(key, 4)
            s1 = 1.0 / np.sqrt(in_size)
            s2 = 1.0 / np.sqrt(hidden_size)
            s3 = 1.0 / np.sqrt(32)
            # stored (in, out): kernels compute x @ W (+ b)
            self.w1 = jax.random.uniform(k1, (in_size, hidden_size), jnp.float32, -s1, s1)
            self.b1 = jax.random.uniform(k2, (1, hidden_size), jnp.float32, -s1, s1)
            self.w2 = jax.random.uniform(k3, (hidden_size, 32), jnp.float32, -s2, s2)
            # final (32 -> 1) projection stored as a row vector (1, 32)
            self.w3 = jax.random.uniform(k4, (1, 32), jnp.float32, -s3, s3)

    def __call__(self, emb_list):
        cfg = _tpu_config()
        emb = jnp.stack(emb_list, axis=0)            # (V, N, D) view-major layout
        V, N, D = emb.shape
        itemsize = jnp.dtype(emb.dtype).itemsize
        sm = _sublane_multiple(itemsize)

        if self.fusion_type in ('average', 'weight'):
            if self.fusion_type == 'average':
                w = jnp.full((1, V), 1.0 / V, jnp.float32)
            else:
                w = jax.nn.softmax(self.weight.astype(jnp.float32))[None, :]
            # Lane-dense flat layout: (V, N, D) -> (V, R, C), C multiple of 128,
            # so every output store is an unmasked full-lane vst.
            F = N * D
            C = min(1024, _round_up(F, 128))
            F_pad = _round_up(F, C)
            flat = emb.reshape(V, F)
            if F_pad != F:
                flat = jnp.pad(flat, ((0, 0), (0, F_pad - F)))
            R = F_pad // C
            x3 = flat.reshape(V, R, C)
            # per row: double-buffered V inputs + output, plus f32 acc/upcast temps
            per_row = C * (2 * (V + 1) * itemsize + 8)
            tile_r = _choose_tile(R, per_row, sm, cfg)
            R_pad = _round_up(R, tile_r)
            if R_pad != R:
                x3 = jnp.pad(x3, ((0, 0), (0, R_pad - R), (0, 0)))
            out3 = _weighted_fusion(
                w, x3, tile_r=tile_r,
                vmem_limit=_vmem_limit(tile_r * per_row, cfg))
            return out3.reshape(-1)[:F].reshape(N, D)

        if self.fusion_type == 'attention':
            H, K = self.hidden_size, 32
            # Pad D to a lane-dense multiple of 128 only when the overhead is
            # small (<= 12.5%); zero feature columns don't perturb the scorer.
            d_full = _round_up(D, 128)
            pad_d = (d_full != D) and ((d_full - D) * 8 <= D)
            if pad_d:
                emb = jnp.pad(emb, ((0, 0), (0, 0), (0, d_full - D)))
            d_used = d_full if pad_d else D
            w1 = self.w1
            if pad_d:
                w1 = jnp.pad(w1, ((0, d_full - D), (0, 0)))
            w1b = w1.astype(jnp.bfloat16)          # scorer matmuls run on the MXU
            w2b = self.w2.astype(jnp.bfloat16)     # in bf16 with f32 accumulation

            # per row: dbuf x/out blocks + bf16 x copy + h (f32+bf16) + t +
            # softmax stats + f32 accumulator & per-view upcast temp.
            per_row = (2 * (V + 1) * d_used * itemsize
                       + V * (2 * d_used + 6 * H + 4 * K + 16)
                       + 8 * d_used)
            fixed = 2 * (d_used * H * 2 + H * K * 2 + 4 * H + 4 * K)  # dbuf weights
            tile_n = _choose_tile(N, per_row, sm, cfg, max_tile=2048)
            n_pad = _round_up(N, tile_n)
            if n_pad != N:
                emb = jnp.pad(emb, ((0, 0), (0, n_pad - N), (0, 0)))
            out = _attention_fusion(
                emb, w1b, self.b1, w2b, self.w3, tile_n=tile_n,
                vmem_limit=_vmem_limit(tile_n * per_row + fixed, cfg))
            return out[:N, :D]

        raise ValueError('Please using a correct fusion type')


# ----------------------------------------------------------------------------
# Pure-JAX reference (for correctness check only)
# ----------------------------------------------------------------------------
def _reference(layer, emb_list):
    if layer.fusion_type == 'average':
        return sum(emb_list) / len(emb_list)
    if layer.fusion_type == 'weight':
        w = jax.nn.softmax(layer.weight)
        return sum(w[i] * e for i, e in enumerate(emb_list))
    # attention
    emb = jnp.stack(emb_list, axis=1)                          # (N, V, D)
    h = jnp.tanh(emb @ layer.w1 + layer.b1[0])                 # (N, V, H)
    t = jnp.tanh(h @ layer.w2)                                 # (N, V, 32)
    s = jnp.sum(t * layer.w3, axis=-1, keepdims=True)          # (N, V, 1)
    w = jax.nn.softmax(s, axis=1)
    return jnp.sum(w * emb, axis=1)                            # (N, D)


# ----------------------------------------------------------------------------
# Main
# ----------------------------------------------------------------------------
if __name__ == "__main__":
    # batch rows (deliberately not a multiple of 8 to exercise row padding),
    # num_views, in_size, hidden_size
    N, V, D, H = 12, 4, 32, 64

    key = jax.random.PRNGKey(0)
    keys = jax.random.split(key, V + 1)
    emb_list = [jax.random.normal(keys[i], (N, D), jnp.float32) for i in range(V)]

    ok = True
    for ftype in ('average', 'weight', 'attention'):
        layer = FusionLayer(V, ftype, D, hidden_size=H, key=keys[-1])
        out = jax.block_until_ready(layer(emb_list))
        ref = _reference(layer, emb_list)
        # attention scorer runs in bf16 on the MXU (f32 reference) -> looser tol
        tol = 2e-2 if ftype == 'attention' else 1e-5
        if out.shape != ref.shape or not np.allclose(
                np.asarray(out), np.asarray(ref), atol=tol, rtol=tol):
            ok = False
            print(f"MISMATCH for fusion_type={ftype}: max_err="
                  f"{np.max(np.abs(np.asarray(out) - np.asarray(ref)))}")

    if ok:
        print("KERNEL_OK")
</pallas_src>

<mosaic_0001>
module attributes {stable_mosaic.version = 11 : i64} {
  func.func @_weighted_sum_kernel(%arg0: i32, %arg1: memref<1x4xf32, #tpu.memory_space<smem>>, %arg2: memref<4x1x384xf32, #tpu.memory_space<vmem>>, %arg3: memref<1x384xf32, #tpu.memory_space<vmem>>) attributes {dimension_semantics = [#tpu.dimension_semantics<parallel>], iteration_bounds = array<i64: 1>, scalar_prefetch = 0 : i64, scratch_operands = 0 : i64, tpu.core_type = #tpu.core_type<tc>, window_params = [{transform_indices = @transform_0, window_bounds = array<i64: 1, 4>}, {transform_indices = @transform_1, window_bounds = array<i64: 4, 1, 384>}, {transform_indices = @transform_2, window_bounds = array<i64: 1, 384>}]} {
    %c0 = arith.constant 0 : index
    %c0_0 = arith.constant 0 : index
    %0 = memref.load %arg1[%c0, %c0_0] : memref<1x4xf32, #tpu.memory_space<smem>>
    %c0_1 = arith.constant 0 : index
    %c0_2 = arith.constant 0 : index
    %c0_3 = arith.constant 0 : index
    %1 = vector.load %arg2[%c0_1, %c0_2, %c0_3] : memref<4x1x384xf32, #tpu.memory_space<vmem>>, vector<1x1x384xf32>
    %2 = vector.shape_cast %1 : vector<1x1x384xf32> to vector<1x384xf32>
    %3 = vector.broadcast %0 : f32 to vector<1x384xf32>
    %4 = arith.mulf %3, %2 : vector<1x384xf32>
    %c0_4 = arith.constant 0 : index
    %c1 = arith.constant 1 : index
    %5 = memref.load %arg1[%c0_4, %c1] : memref<1x4xf32, #tpu.memory_space<smem>>
    %c1_5 = arith.constant 1 : index
    %c0_6 = arith.constant 0 : index
    %c0_7 = arith.constant 0 : index
    %6 = vector.load %arg2[%c1_5, %c0_6, %c0_7] : memref<4x1x384xf32, #tpu.memory_space<vmem>>, vector<1x1x384xf32>
    %7 = vector.shape_cast %6 : vector<1x1x384xf32> to vector<1x384xf32>
    %8 = vector.broadcast %5 : f32 to vector<1x384xf32>
    %9 = arith.mulf %8, %7 : vector<1x384xf32>
    %10 = arith.addf %4, %9 : vector<1x384xf32>
    %c0_8 = arith.constant 0 : index
    %c2 = arith.constant 2 : index
    %11 = memref.load %arg1[%c0_8, %c2] : memref<1x4xf32, #tpu.memory_space<smem>>
    %c2_9 = arith.constant 2 : index
    %c0_10 = arith.constant 0 : index
    %c0_11 = arith.constant 0 : index
    %12 = vector.load %arg2[%c2_9, %c0_10, %c0_11] : memref<4x1x384xf32, #tpu.memory_space<vmem>>, vector<1x1x384xf32>
    %13 = vector.shape_cast %12 : vector<1x1x384xf32> to vector<1x384xf32>
    %14 = vector.broadcast %11 : f32 to vector<1x384xf32>
    %15 = arith.mulf %14, %13 : vector<1x384xf32>
    %16 = arith.addf %10, %15 : vector<1x384xf32>
    %c0_12 = arith.constant 0 : index
    %c3 = arith.constant 3 : index
    %17 = memref.load %arg1[%c0_12, %c3] : memref<1x4xf32, #tpu.memory_space<smem>>
    %c3_13 = arith.constant 3 : index
    %c0_14 = arith.constant 0 : index
    %c0_15 = arith.constant 0 : index
    %18 = vector.load %arg2[%c3_13, %c0_14, %c0_15] : memref<4x1x384xf32, #tpu.memory_space<vmem>>, vector<1x1x384xf32>
    %19 = vector.shape_cast %18 : vector<1x1x384xf32> to vector<1x384xf32>
    %20 = vector.broadcast %17 : f32 to vector<1x384xf32>
    %21 = arith.mulf %20, %19 : vector<1x384xf32>
    %22 = arith.addf %16, %21 : vector<1x384xf32>
    %c0_16 = arith.constant 0 : index
    %c0_17 = arith.constant 0 : index
    %23 = vector.load %arg3[%c0_16, %c0_17] : memref<1x384xf32, #tpu.memory_space<vmem>>, vector<1x384xf32>
    tpu.vector_store %arg3[%c0_16, %c0_17], %22 {strides = array<i32>} : memref<1x384xf32, #tpu.memory_space<vmem>>, vector<1x384xf32>,
    return
  }
  func.func @transform_0(%arg0: i32) -> (i32, i32) {
    %c0_i32 = arith.constant 0 : i32
    %c0_i32_0 = arith.constant 0 : i32
    %c0_i32_1 = arith.constant 0 : i32
    return %c0_i32, %c0_i32_0 : i32, i32
  }
  func.func @transform_1(%arg0: i32) -> (i32, i32, i32) {
    %c0_i32 = arith.constant 0 : i32
    %c0_i32_0 = arith.constant 0 : i32
    %c0_i32_1 = arith.constant 0 : i32
    return %c0_i32, %arg0, %c0_i32_0 : i32, i32, i32
  }
  func.func @transform_2(%arg0: i32) -> (i32, i32) {
    %c0_i32 = arith.constant 0 : i32
    %c0_i32_0 = arith.constant 0 : i32
    return %arg0, %c0_i32 : i32, i32
  }
}

</mosaic_0001>

<llo_original>
// kernel: tpu_custom_call.1
$region0: #{tpu_custom_call.1}
  #allocation0 [shape = 'u32[]', space=smem, size = 0x4, offset = 0x4, fixed_abs, tag = 'smem constant byte address 0x4 - core index']
  #allocation1 [shape = 'u32[144,128]{1,0:T(1,128)}', space=vmem, size = 0x12000, scoped, tag = 'internal scratch']
  %s0 = inlined_call_operand.hbm [shape: f32[1,4], index: 0, kind: input, shape index: {}]
  %s1 = inlined_call_operand.hbm [shape: f32[4,1,384], index: 1, kind: input, shape index: {}]
  %s2 = inlined_call_operand.hbm [shape: f32[1,384], index: 2, kind: output, shape index: {}]
  %s3 = sld [smem:[#allocation0]]
  $region26: #{tpu_custom_call.1} parent=0
    _
  %s5 = ssub.s32 1, %s3
  %s6 = scalar_select 0, %s5, %s3
  $region1: #{tpu_custom_call.1} parent=0
    #allocation2 [shape = 'u8[512]{0}', space=smem, size = 0x200, scoped, tag = 'input window, operand 0, single buffered']
    #allocation3 [shape = 's32[1]{0}', space=sflag, size = 0x4, scoped, tag = 'scoped memory for tpu_custom_call.1']
    #allocation4 [shape = 's32[1]{0}', space=sflag, size = 0x4, scoped, tag = 'scoped memory for tpu_custom_call.1']
    #allocation5 [shape = 's32[1]{0}', space=sflag, size = 0x4, scoped, tag = 'scoped memory for tpu_custom_call.1']
    #allocation6 [shape = 'u8[6144]{0}', space=vmem, size = 0x1800, scoped, tag = 'input window, operand 1, single buffered']
    #allocation7 [shape = 'u8[1536]{0}', space=vmem, size = 0x800, scoped, tag = 'output window, operand 0, single buffered']
    %7 = vsyncpa [#allocation5], 0
    %8 = vsyncpa [#allocation3], 0
    %9 = vsyncpa [#allocation4], 0
    // Predicated region
    $region2: #{tpu_custom_call.1} parent=1 // pred_check
      _
    $region3: #{tpu_custom_call.1} parent=1 // pred_check_branch
      %11 = sbr.rel (0) target = $region5
    $region4: #{tpu_custom_call.1} parent=1 // pred_region
      %s13 = ssub.s32 16, 16
      %14 = vsyncadd [#allocation5], %s13
      %17 = dma.hbm_to_smem %s0, 16, [#allocation2], [#allocation5]
    $region5: #{tpu_custom_call.1} parent=1 // pred_fallthru
      _
    // Predicated region
    $region6: #{tpu_custom_call.1} parent=1 // pred_check
      _
    $region7: #{tpu_custom_call.1} parent=1 // pred_check_branch
      %19 = sbr.rel (0) target = $region9
    $region8: #{tpu_custom_call.1} parent=1 // pred_region
      %s21 = ssub.s32 192, 192
      %22 = vsyncadd [#allocation3], %s21
      %s23 = sshll.u32 [#allocation6], 4
      %s24 = int_to_ptr.vmem [resolvable:$true] %s23
      %29 = dma.hbm_to_vmem [thread:$0]  %s1, 192, %s24, [#allocation3], 48, 48, 3
    $region9: #{tpu_custom_call.1} parent=1 // pred_fallthru
      _
    // Predicated region
    $region10: #{tpu_custom_call.1} parent=1 // pred_check
      _
    $region11: #{tpu_custom_call.1} parent=1 // pred_check_branch
      %31 = sbr.rel (0) target = $region13
    $region12: #{tpu_custom_call.1} parent=1 // pred_region
      %32 = dma.done [#allocation5], 16
    $region13: #{tpu_custom_call.1} parent=1 // pred_fallthru
      _
    // Predicated region
    $region14: #{tpu_custom_call.1} parent=1 // pred_check
      _
    $region15: #{tpu_custom_call.1} parent=1 // pred_check_branch
      %34 = sbr.rel (0) target = $region17
    $region16: #{tpu_custom_call.1} parent=1 // pred_region
      %35 = dma.done [#allocation3], 192
    $region17: #{tpu_custom_call.1} parent=1 // pred_fallthru
      _
    %36 = sfence
    %s37 = sld [smem:[#allocation2]]
    %v38 = vld [vmem:[#allocation6] sm:$0x7]
    %v39 = vstv %s37
    %v40 = vmul.f32 %v39, %v38
    %s41 = sld [smem:[#allocation2 + $0x1]]
    %s42 = scalar_lea.vmem [#allocation6], 3
    %v43 = vld [vmem:[%s42] sm:$0x7]
    %v44 = vstv %s41
    %v45 = vmul.f32 %v44, %v43
    %v46 = vadd.f32 %v40, %v45
    %s47 = sld [smem:[#allocation2 + $0x2]]
    %s48 = scalar_lea.vmem [#allocation6], 6
    %v49 = vld [vmem:[%s48] sm:$0x7]
    %v50 = vstv %s47
    %v51 = vmul.f32 %v50, %v49
    %v52 = vadd.f32 %v46, %v51
    %s53 = sld [smem:[#allocation2 + $0x3]]
    %s54 = scalar_lea.vmem [#allocation6], 9
    %v55 = vld [vmem:[%s54] sm:$0x7]
    %v56 = vstv %s53
    %v57 = vmul.f32 %v56, %v55
    %v58 = vadd.f32 %v52, %v57
    %v59 = vlaneseq
    %vm60 = vcmp.ge.s32.totalorder %v59, 0
    %vm61 = vcmp.lt.s32.totalorder %v59, 384
    %vm62 = vmand %vm60, %vm61
    %63 = vst.msk [vmem:[#allocation7] sm:$0x7] %vm62, %v58
    // Predicated region
    $region18: #{tpu_custom_call.1} parent=1 // pred_check
      _
    $region19: #{tpu_custom_call.1} parent=1 // pred_check_branch
      %65 = sbr.rel (0) target = $region21
    $region20: #{tpu_custom_call.1} parent=1 // pred_region
      %s67 = ssub.s32 48, 48
      %68 = vsyncadd [#allocation4], %s67
      %s70 = sshll.u32 [#allocation7], 4
      %s71 = int_to_ptr.vmem [resolvable:$true] %s70
      %73 = dma.vmem_to_hbm [thread:$0]  %s71, 48, %s2, [#allocation4]
    $region21: #{tpu_custom_call.1} parent=1 // pred_fallthru
      _
    // Predicated region
    $region22: #{tpu_custom_call.1} parent=1 // pred_check
      _
    $region23: #{tpu_custom_call.1} parent=1 // pred_check_branch
      %75 = sbr.rel (0) target = $region25
    $region24: #{tpu_custom_call.1} parent=1 // pred_region
      %76 = dma.done [#allocation4], 48
    $region25: #{tpu_custom_call.1} parent=1 // pred_fallthru
      _
    %77 = vsyncpa [#allocation3], 1
    %78 = vsyncpa [#allocation4], 1
    %79 = vsyncpa [#allocation5], 1

</llo_original>
